<compile_context>
chip_gen: v6e
topology: v6e:2x2x1
jax: 0.10.0
libtpu: 0.0.40
codegen_flags: <defaults>
</compile_context>

<pallas_src>
import jax
import jax.numpy as jnp
from jax.experimental import pallas as pl
from jax.experimental.pallas import tpu as pltpu

_EPS = 1e-12                     # torch F.normalize default eps (clamp on the norm)
_LANES = 128
_TARGET_BLOCK_BYTES = 2 << 20    # ~2 MiB of input per grid step
_MIN_ROW_TILE = 512              # never shrink a step below this many rows
_MAX_ROW_TILE = 8192
_F32_TEMP_BYTES = 24             # f32 intermediates per element inside the body


def _cdiv(a: int, b: int) -> int:
    return -(-a // b)


def _sublane_pack(dtype) -> int:
    # Native sublane packing: f32 -> 8, bf16/f16 -> 16, int8/fp8 -> 32.
    return 8 * max(1, 4 // jnp.dtype(dtype).itemsize)


def _vmem_budget_bytes() -> int:
    cap = 64 * 1024 * 1024
    try:
        cap = int(pltpu.get_tpu_info().vmem_capacity_bytes)
    except Exception:
        pass
    # Clamp to the per-TensorCore figure so an ambiguous (chip-level) report
    # on v7x can never over-size the tile or the vmem limit.
    return min(cap, 64 * 1024 * 1024)


def _pick_row_tile(mp: int, w: int, itemsize: int, pack: int, vmem_budget: int) -> int:
    """Row tile: ~2 MiB per input block, VMEM-safe, >= ~8 steps on big problems."""
    per_row_block = w * itemsize
    per_row_pipe = w * (4 * itemsize + _F32_TEMP_BYTES)   # dbl-buffered io + f32 temps
    vmem_rows = max(1, (vmem_budget // 3) // per_row_pipe)
    tm = max(1, _TARGET_BLOCK_BYTES // per_row_block)
    tm = min(tm, vmem_rows, _MAX_ROW_TILE)
    # Keep >= ~8 grid steps when the problem is large (pipeline overlap +
    # megacore sharding), but never shrink a step below _MIN_ROW_TILE rows.
    tm = min(tm, max(_MIN_ROW_TILE, _cdiv(mp, 8)))
    tm = max(pack, (tm // pack) * pack)
    if tm >= mp:
        return mp                                          # one full-extent block
    return tm


def _l2norm_plain_kernel(x_ref, o_ref):
    """Plain path: block last dim is the full feature dim d."""
    x = x_ref[...].astype(jnp.float32)                      # (tm, d)
    sq = jnp.sum(x * x, axis=-1, keepdims=True)             # exact f32
    inv = jax.lax.rsqrt(jnp.maximum(sq, _EPS * _EPS))       # == 1/max(||x||, eps)
    o_ref[...] = (x * inv).astype(o_ref.dtype)


def _l2norm_packed_kernel(bdiag_ref, x_ref, o_ref):
    """Lane-dense path: g = 128/d rows packed per 128-wide row; MXU reduction."""
    x = x_ref[...].astype(jnp.float32)                      # (tm, 128)
    x2 = x * x
    # Split x2 into an exact bf16 high part + bf16 low remainder: the
    # segmented sum is then accurate to ~2^-17 regardless of MXU matmul
    # precision semantics, at a fixed cost of two bf16 passes.
    hi = x2.astype(jnp.bfloat16)
    lo = (x2 - hi.astype(jnp.float32)).astype(jnp.bfloat16)
    b = bdiag_ref[...]                                      # (128, 128) 0/1 block-diag
    s = (jnp.dot(hi, b, preferred_element_type=jnp.float32)
         + jnp.dot(lo, b, preferred_element_type=jnp.float32))
    inv = jax.lax.rsqrt(jnp.maximum(s, _EPS * _EPS))
    o_ref[...] = (x * inv).astype(o_ref.dtype)


def l2norm(x: jax.Array) -> jax.Array:
    """L2-normalize along the last axis of a (b, h, n, d) array."""
    b, h, n, d = x.shape
    m = b * h * n
    itemsize = jnp.dtype(x.dtype).itemsize
    pack = _sublane_pack(x.dtype)
    vmem_budget = _vmem_budget_bytes()

    # Lane-dense packing only when the reshape is a zero-copy metadata op.
    g = _LANES // d if (d < _LANES and _LANES % d == 0) else 1
    packing = (g > 1) and (m % g == 0)
    if not packing:
        g = 1
    w = g * d
    mp = m // g

    x2d = x.reshape(m, d)                                   # free (contiguous)
    xp = x2d.reshape(mp, w) if packing else x2d             # free (contiguous)

    tm = _pick_row_tile(mp, w, itemsize, pack, vmem_budget)
    grid = (pl.cdiv(mp, tm),)

    in_specs = [pl.BlockSpec((tm, w), lambda i: (i, 0))]
    operands = [xp]
    extra_bytes = 0
    if packing:
        lane = jnp.arange(w, dtype=jnp.int32)
        bdiag = (lane[:, None] // d == lane[None, :] // d).astype(jnp.bfloat16)
        in_specs = [pl.BlockSpec((w, w), lambda i: (0, 0))] + in_specs  # VMEM-resident
        operands = [bdiag] + operands
        extra_bytes = w * w * 2
        kernel = _l2norm_packed_kernel
        mxu_flops = 2 * 2 * mp * w * w                      # two (tm,w)@(w,w) bf16 passes
        trans = mp * w
    else:
        kernel = _l2norm_plain_kernel
        mxu_flops = 0
        trans = m

    footprint = (4 * tm * w * itemsize                      # double-buffered in + out
                 + _F32_TEMP_BYTES * tm * w                 # f32 intermediates
                 + 2 * extra_bytes)                         # resident bdiag (packed)
    vmem_limit = int(min(vmem_budget, footprint + (8 << 20)))

    outp = pl.pallas_call(
        kernel,
        out_shape=jax.ShapeDtypeStruct((mp, w), x.dtype),
        grid_spec=pltpu.PrefetchScalarGridSpec(
            num_scalar_prefetch=0,
            grid=grid,
            in_specs=in_specs,
            out_specs=pl.BlockSpec((tm, w), lambda i: (i, 0)),
        ),
        compiler_params=pltpu.CompilerParams(
            dimension_semantics=("parallel",),
            vmem_limit_bytes=vmem_limit,
        ),
        cost_estimate=pl.CostEstimate(
            flops=int(4 * m * d + mxu_flops),
            transcendentals=int(trans),
            bytes_accessed=int(2 * m * d * itemsize + extra_bytes),
        ),
    )(*operands)

    return outp.reshape(b, h, n, d)                         # free (contiguous)


def _l2norm_ref(x: jax.Array) -> jax.Array:
    xf = x.astype(jnp.float32)
    norm = jnp.sqrt(jnp.sum(xf * xf, axis=-1, keepdims=True))
    return (xf / jnp.maximum(norm, _EPS)).astype(x.dtype)


if __name__ == "__main__":
    key0, key1 = jax.random.split(jax.random.PRNGKey(0), 2)
    l2norm_jit = jax.jit(l2norm)

    # Packed path: d = 32 divides 128 -> 4 rows per lane-dense 128-wide row.
    x1 = jax.random.normal(key0, (2, 4, 8, 32), dtype=jnp.float32)
    o1 = jax.block_until_ready(l2norm_jit(x1))
    r1 = _l2norm_ref(x1)
    assert o1.shape == x1.shape and o1.dtype == x1.dtype
    assert bool(jnp.allclose(o1, r1, atol=2e-5, rtol=2e-5)), float(
        jnp.max(jnp.abs(o1 - r1)))

    # Plain path: d = 48 does not divide 128 (full-d block, no packing).
    x2 = jax.random.normal(key1, (2, 3, 5, 48), dtype=jnp.float32)
    o2 = jax.block_until_ready(l2norm_jit(x2))
    r2 = _l2norm_ref(x2)
    assert o2.shape == x2.shape and o2.dtype == x2.dtype
    assert bool(jnp.allclose(o2, r2, atol=2e-5, rtol=2e-5)), float(
        jnp.max(jnp.abs(o2 - r2)))

    print("KERNEL_OK")
</pallas_src>

<mosaic_0001>
module attributes {stable_mosaic.version = 11 : i64} {
  func.func @_l2norm_packed_kernel(%arg0: i32, %arg1: memref<128x128xbf16, #tpu.memory_space<vmem>>, %arg2: memref<16x128xf32, #tpu.memory_space<vmem>>, %arg3: memref<16x128xf32, #tpu.memory_space<vmem>>) attributes {dimension_semantics = [#tpu.dimension_semantics<parallel>], iteration_bounds = array<i64: 1>, scalar_prefetch = 0 : i64, scratch_operands = 0 : i64, tpu.core_type = #tpu.core_type<tc>, window_params = [{pipeline_mode = #tpu.pipeline_mode<synchronous>, transform_indices = @transform_0, window_bounds = array<i64: 128, 128>}, {transform_indices = @transform_1, window_bounds = array<i64: 16, 128>}, {transform_indices = @transform_2, window_bounds = array<i64: 16, 128>}]} {
    %c0 = arith.constant 0 : index
    %c0_0 = arith.constant 0 : index
    %0 = vector.load %arg2[%c0, %c0_0] : memref<16x128xf32, #tpu.memory_space<vmem>>, vector<16x128xf32>
    %1 = arith.mulf %0, %0 : vector<16x128xf32>
    %2 = arith.truncf %1 : vector<16x128xf32> to vector<16x128xbf16>
    %3 = arith.extf %2 : vector<16x128xbf16> to vector<16x128xf32>
    %4 = arith.subf %1, %3 : vector<16x128xf32>
    %5 = arith.truncf %4 : vector<16x128xf32> to vector<16x128xbf16>
    %c0_1 = arith.constant 0 : index
    %c0_2 = arith.constant 0 : index
    %6 = vector.load %arg1[%c0_1, %c0_2] : memref<128x128xbf16, #tpu.memory_space<vmem>>, vector<128x128xbf16>
    %cst = arith.constant dense<0.000000e+00> : vector<16x128xf32>
    %7 = tpu.matmul %2, %6, %cst {dimension_numbers = #tpu.dot_dimension_numbers<[1], [0], [0], [1], [0, 0, 1, 1], [], []>} : vector<16x128xbf16>, vector<128x128xbf16>, vector<16x128xf32> -> vector<16x128xf32>
    %cst_3 = arith.constant dense<0.000000e+00> : vector<16x128xf32>
    %8 = tpu.matmul %5, %6, %cst_3 {dimension_numbers = #tpu.dot_dimension_numbers<[1], [0], [0], [1], [0, 0, 1, 1], [], []>} : vector<16x128xbf16>, vector<128x128xbf16>, vector<16x128xf32> -> vector<16x128xf32>
    %9 = arith.addf %7, %8 : vector<16x128xf32>
    %cst_4 = arith.constant 1.000000e-24 : f32
    %10 = vector.broadcast %cst_4 : f32 to vector<16x128xf32>
    %11 = arith.maximumf %9, %10 : vector<16x128xf32>
    %12 = math.rsqrt %11 : vector<16x128xf32>
    %13 = arith.mulf %0, %12 : vector<16x128xf32>
    %c0_5 = arith.constant 0 : index
    %c0_6 = arith.constant 0 : index
    %14 = vector.load %arg3[%c0_5, %c0_6] : memref<16x128xf32, #tpu.memory_space<vmem>>, vector<16x128xf32>
    tpu.vector_store %arg3[%c0_5, %c0_6], %13 {strides = array<i32>} : memref<16x128xf32, #tpu.memory_space<vmem>>, vector<16x128xf32>,
    return
  }
  func.func @transform_0(%arg0: i32) -> (i32, i32) {
    %c0_i32 = arith.constant 0 : i32
    %c0_i32_0 = arith.constant 0 : i32
    %c0_i32_1 = arith.constant 0 : i32
    return %c0_i32, %c0_i32_0 : i32, i32
  }
  func.func @transform_1(%arg0: i32) -> (i32, i32) {
    %c0_i32 = arith.constant 0 : i32
    %c0_i32_0 = arith.constant 0 : i32
    return %arg0, %c0_i32 : i32, i32
  }
  func.func @transform_2(%arg0: i32) -> (i32, i32) {
    %c0_i32 = arith.constant 0 : i32
    %c0_i32_0 = arith.constant 0 : i32
    return %arg0, %c0_i32 : i32, i32
  }
}

</mosaic_0001>

<llo_original>
// kernel: l2norm.1
$region0: #{l2norm.1}
  #allocation0 [shape = 'u32[]', space=smem, size = 0x4, offset = 0x4, fixed_abs, tag = 'smem constant byte address 0x4 - core index']
  #allocation1 [shape = 'u32[144,128]{1,0:T(1,128)}', space=vmem, size = 0x12000, scoped, tag = 'internal scratch']
  %s0 = inlined_call_operand.vmem [shape: bf16[128,128], index: 0, kind: input, shape index: {}]
  %s1 = inlined_call_operand.vmem [shape: f32[16,128], index: 1, kind: input, shape index: {}]
  %s2 = inlined_call_operand.vmem [shape: f32[16,128], index: 2, kind: output, shape index: {}]
  %s3 = sld [smem:[#allocation0]]
  $region18: #{l2norm.1} parent=0
    _
  %s5 = ssub.s32 1, %s3
  %s6 = scalar_select 0, %s5, %s3
  // Predicated region
  $region2: #{l2norm.1} parent=0 // pred_check
    _
  $region3: #{l2norm.1} parent=0 // pred_check_branch
    %8 = sbr.rel (0) target = $region5
  $region4: #{l2norm.1} parent=0 // pred_region
    _
  $region5: #{l2norm.1} parent=0 // pred_fallthru
    _
  // Predicated region
  $region6: #{l2norm.1} parent=0 // pred_check
    _
  $region7: #{l2norm.1} parent=0 // pred_check_branch
    %10 = sbr.rel (0) target = $region9
  $region8: #{l2norm.1} parent=0 // pred_region
    _
  $region9: #{l2norm.1} parent=0 // pred_fallthru
    _
  %v12 = vld [vmem:[%s1] sm:$0xff]
  %v13 = vld [vmem:[%s1 + $0x8] sm:$0xff]
  %v14 = vmul.f32 %v12, %v12
  %v15 = vmul.f32 %v13, %v13
  %v16 = vpack.c.bf16 %v15, %v14
  %v17 = vunpack.c.l.bf16 %v16
  %v18 = vunpack.c.h.bf16 %v16
  %v19 = vsub.f32 %v14, %v17
  %v20 = vsub.f32 %v15, %v18
  %v21 = vpack.c.bf16 %v20, %v19
  %v22 = vld [vmem:[%s0] sm:$0xf]
  %v23 = vld [vmem:[%s0 + $0x4] sm:$0xf]
  %v24 = vld [vmem:[%s0 + $0x8] sm:$0xf]
  %v25 = vld [vmem:[%s0 + $0xc] sm:$0xf]
  %v26 = vld [vmem:[%s0 + $0x10] sm:$0xf]
  %v27 = vld [vmem:[%s0 + $0x14] sm:$0xf]
  %v28 = vld [vmem:[%s0 + $0x18] sm:$0xf]
  %v29 = vld [vmem:[%s0 + $0x1c] sm:$0xf]
  %v30 = vld [vmem:[%s0 + $0x20] sm:$0xf]
  %v31 = vld [vmem:[%s0 + $0x24] sm:$0xf]
  %v32 = vld [vmem:[%s0 + $0x28] sm:$0xf]
  %v33 = vld [vmem:[%s0 + $0x2c] sm:$0xf]
  %v34 = vld [vmem:[%s0 + $0x30] sm:$0xf]
  %v35 = vld [vmem:[%s0 + $0x34] sm:$0xf]
  %v36 = vld [vmem:[%s0 + $0x38] sm:$0xf]
  %v37 = vld [vmem:[%s0 + $0x3c] sm:$0xf]
  %v54 = vunpack.c.l.b16 %v22
  %v55 = vunpack.c.l.b16 %v23
  %v56 = vunpack.c.l.b16 %v24
  %v57 = vunpack.c.l.b16 %v25
  %v58 = vunpack.c.l.b16 %v26
  %v59 = vunpack.c.l.b16 %v27
  %v60 = vunpack.c.l.b16 %v28
  %v61 = vunpack.c.l.b16 %v29
  %v62 = vunpack.c.l.b16 %v30
  %v63 = vunpack.c.l.b16 %v31
  %v64 = vunpack.c.l.b16 %v32
  %v65 = vunpack.c.l.b16 %v33
  %v66 = vunpack.c.l.b16 %v34
  %v67 = vunpack.c.l.b16 %v35
  %v68 = vunpack.c.l.b16 %v36
  %v69 = vunpack.c.l.b16 %v37
  %v70 = vpack.c.b16 %v55, %v54
  %v71 = vpack.c.b16 %v57, %v56
  %v72 = vpack.c.b16 %v59, %v58
  %v73 = vpack.c.b16 %v61, %v60
  %v74 = vpack.c.b16 %v63, %v62
  %v75 = vpack.c.b16 %v65, %v64
  %v76 = vpack.c.b16 %v67, %v66
  %v77 = vpack.c.b16 %v69, %v68
  %86 = vmatprep.subr.bf16.mxu0 0
  %87 = vmatpush1.bf16.msra.mxu0 %v77
  %88 = vmatprep.subr.bf16.mxu0 0
  %89 = vmatpush1.bf16.msra.mxu0 %v76
  %90 = vmatprep.subr.bf16.mxu0 0
  %91 = vmatpush1.bf16.msra.mxu0 %v75
  %92 = vmatprep.subr.bf16.mxu0 0
  %93 = vmatpush1.bf16.msra.mxu0 %v74
  %94 = vmatprep.subr.bf16.mxu0 0
  %95 = vmatpush1.bf16.msra.mxu0 %v73
  %96 = vmatprep.subr.bf16.mxu0 0
  %97 = vmatpush1.bf16.msra.mxu0 %v72
  %98 = vmatprep.subr.bf16.mxu0 0
  %99 = vmatpush1.bf16.msra.mxu0 %v71
  %100 = vmatprep.subr.bf16.mxu0 0
  %101 = vmatpush1.bf16.msra.mxu0 %v70
  %102 = vmatprep.subr.bf16.mxu0 0
  %103 = vmatpush2.bf16.msra.mxu0 0
  %104 = vmatprep.subr.bf16.mxu0 0
  %105 = vmatpush2.bf16.msra.mxu0 0
  %106 = vmatprep.subr.bf16.mxu0 0
  %107 = vmatpush2.bf16.msra.mxu0 0
  %108 = vmatprep.subr.bf16.mxu0 0
  %109 = vmatpush2.bf16.msra.mxu0 0
  %110 = vmatprep.subr.bf16.mxu0 0
  %111 = vmatpush2.bf16.msra.mxu0 0
  %112 = vmatprep.subr.bf16.mxu0 0
  %113 = vmatpush2.bf16.msra.mxu0 0
  %114 = vmatprep.subr.bf16.mxu0 0
  %115 = vmatpush2.bf16.msra.mxu0 0
  %116 = vmatprep.subr.bf16.mxu0 0
  %117 = vmatpush2.bf16.msra.mxu0 0
  %118 = vmatprep.mubr.bf16.mxu0 0
  %119 = vmatmul.mubr.bf16.gmra.mxu0 %v21
  %v120 = vpop.f32.mrf.mxu0
  %v121 = vadd.f32 0.0, %v120
  %v122 = vpop.f32.mrf.mxu0
  %v123 = vpop.f32.mrf.mxu0
  %v124 = vadd.f32 0.0, %v123
  %v125 = vpop.f32.mrf.mxu0
  %126 = vdwg.mxu0
  %127 = vmatprep.subr.bf16.mxu0 0
  %128 = vmatpush1.bf16.msra.mxu0 %v77
  %129 = vmatprep.subr.bf16.mxu0 0
  %130 = vmatpush1.bf16.msra.mxu0 %v76
  %131 = vmatprep.subr.bf16.mxu0 0
  %132 = vmatpush1.bf16.msra.mxu0 %v75
  %133 = vmatprep.subr.bf16.mxu0 0
  %134 = vmatpush1.bf16.msra.mxu0 %v74
  %135 = vmatprep.subr.bf16.mxu0 0
  %136 = vmatpush1.bf16.msra.mxu0 %v73
  %137 = vmatprep.subr.bf16.mxu0 0
  %138 = vmatpush1.bf16.msra.mxu0 %v72
  %139 = vmatprep.subr.bf16.mxu0 0
  %140 = vmatpush1.bf16.msra.mxu0 %v71
  %141 = vmatprep.subr.bf16.mxu0 0
  %142 = vmatpush1.bf16.msra.mxu0 %v70
  %143 = vmatprep.subr.bf16.mxu0 0
  %144 = vmatpush2.bf16.msra.mxu0 0
  %145 = vmatprep.subr.bf16.mxu0 0
  %146 = vmatpush2.bf16.msra.mxu0 0
  %147 = vmatprep.subr.bf16.mxu0 0
  %148 = vmatpush2.bf16.msra.mxu0 0
  %149 = vmatprep.subr.bf16.mxu0 0
  %150 = vmatpush2.bf16.msra.mxu0 0
  %151 = vmatprep.subr.bf16.mxu0 0
  %152 = vmatpush2.bf16.msra.mxu0 0
  %153 = vmatprep.subr.bf16.mxu0 0
  %154 = vmatpush2.bf16.msra.mxu0 0
  %155 = vmatprep.subr.bf16.mxu0 0
  %156 = vmatpush2.bf16.msra.mxu0 0
  %157 = vmatprep.subr.bf16.mxu0 0
  %158 = vmatpush2.bf16.msra.mxu0 0
  %159 = vmatprep.mubr.bf16.mxu0 0
  %160 = vmatmul.mubr.bf16.gmra.mxu0 %v16
  %v161 = vpop.f32.mrf.mxu0
  %v162 = vadd.f32 %v121, %v161
  %v163 = vpop.f32.mrf.mxu0
  %v164 = vpop.f32.mrf.mxu0
  %v165 = vadd.f32 %v124, %v164
  %v166 = vpop.f32.mrf.mxu0
  %167 = vdwg.mxu0
  %v168 = vmax.f32 %v162, 1e-24
  %v169 = vmax.f32 %v165, 1e-24
  %v170 = vrsqrt.pop %v168
  %v171 = vrsqrt.pop %v169
  %v172 = vmul.f32 %v12, %v170
  %v173 = vmul.f32 %v13, %v171
  %174 = vst [vmem:[%s2] sm:$0xff] %v172
  %175 = vst [vmem:[%s2 + $0x8] sm:$0xff] %v173
  // Predicated region
  $region10: #{l2norm.1} parent=0 // pred_check
    _
  $region11: #{l2norm.1} parent=0 // pred_check_branch
    %177 = sbr.rel (0) target = $region13
  $region12: #{l2norm.1} parent=0 // pred_region
    _
  $region13: #{l2norm.1} parent=0 // pred_fallthru
    _
  // Predicated region
  $region14: #{l2norm.1} parent=0 // pred_check
    _
  $region15: #{l2norm.1} parent=0 // pred_check_branch
    %179 = sbr.rel (0) target = $region17
  $region16: #{l2norm.1} parent=0 // pred_region
    _
  $region17: #{l2norm.1} parent=0 // pred_fallthru
    _

</llo_original>
